<compile_context>
chip_gen: v6e
topology: v6e:2x2x1
jax: 0.10.0
libtpu: 0.0.40
codegen_flags: <defaults>
</compile_context>

<pallas_src>
import functools

import jax
import jax.numpy as jnp
from jax.experimental import pallas as pl
from jax.experimental.pallas import tpu as pltpu

_EPS = 1e-6  # torch.nn.PairwiseDistance default eps (added to the difference)


def _round_up(x, m):
    return ((x + m - 1) // m) * m


def _cdiv(a, b):
    return -(-a // b)


def _vmem_capacity_bytes():
    try:
        info = pltpu.get_tpu_info()
        cap = getattr(info, "vmem_capacity_bytes", None)
        if cap:
            return int(cap)
    except Exception:
        pass
    return 64 * 1024 * 1024  # conservative fallback (v7x per-TC VMEM)


# ----------------------------------------------------------------------------
# Glue: Block_embedding.extract_image_blocks  (replicate same-padding + unfold)
# ----------------------------------------------------------------------------
def extract_blocks(x, ksize, stride):
    """x: (1, C, H, W) NCHW.  Returns (L, C*ksize*ksize) float32 blocks,
    matching torch Unfold(...)(x).squeeze(0).permute(1, 0)."""
    _, C, H, W = x.shape
    out_h = (H + stride - 1) // stride
    out_w = (W + stride - 1) // stride
    pad_rows = max(0, (out_h - 1) * stride + ksize - H)
    pad_cols = max(0, (out_w - 1) * stride + ksize - W)
    pt = pad_rows // 2
    pb = pad_rows - pt
    pleft = pad_cols // 2
    pright = pad_cols - pleft
    xp = jnp.pad(x, ((0, 0), (0, 0), (pt, pb), (pleft, pright)), mode="edge")[0]
    rows = (jnp.arange(out_h) * stride)[:, None] + jnp.arange(ksize)[None, :]
    cols = (jnp.arange(out_w) * stride)[:, None] + jnp.arange(ksize)[None, :]
    # (C, out_h, out_w, k, k) via broadcasted advanced indexing
    patches = xp[:, rows[:, None, :, None], cols[None, :, None, :]]
    # torch Unfold feature order is (C, kh, kw); window order is row-major.
    patches = jnp.transpose(patches, (1, 2, 0, 3, 4))  # (out_h, out_w, C, k, k)
    return patches.reshape(out_h * out_w, C * ksize * ksize).astype(jnp.float32)


# ----------------------------------------------------------------------------
# Pallas kernel: streamed pairwise-score + per-key online argmin.
#   score(k, q) = 0.5*(||k-q+eps||^2 - const_k) = qterm_half(q) - k.q
# Padded feature lanes are zero (contribute nothing); padded query columns
# carry qterm_half = +inf so they never win the argmin.
# ----------------------------------------------------------------------------
def _dist_argmin_kernel(key_ref, query_ref, qterm_ref, out_ref,
                        min_val, min_idx, *acc, tq, nkd):
    j = pl.program_id(1)
    last_j = pl.num_programs(1) - 1

    def online_argmin(score):
        # first-occurrence argmin within this query tile
        tile_min = jnp.min(score, axis=-1, keepdims=True)               # (tk, 1)
        lane = jax.lax.broadcasted_iota(jnp.int32, (1, score.shape[-1]), 1)
        cand = jnp.where(score <= tile_min, lane, jnp.int32(2 ** 30))
        tile_idx = jnp.min(cand, axis=-1, keepdims=True) + j * tq       # (tk, 1)
        # strict < keeps the earliest query tile on exact ties (torch.topk order)
        better = tile_min < min_val[...]
        min_idx[...] = jnp.where(better, tile_idx, min_idx[...])
        min_val[...] = jnp.where(better, tile_min, min_val[...])

    if nkd == 1:
        # Single D-chunk: no cross-term accumulator needed.
        @pl.when(j == 0)
        def _():
            min_val[...] = jnp.full_like(min_val, jnp.inf)
            min_idx[...] = jnp.zeros_like(min_idx)

        cross = jnp.dot(key_ref[...], query_ref[...],
                        preferred_element_type=jnp.float32)             # (tk, tq)
        online_argmin(qterm_ref[...] - cross)

        @pl.when(j == last_j)
        def _():
            out_ref[...] = min_idx[...]
    else:
        cross_acc = acc[0]
        kd = pl.program_id(2)
        last_kd = nkd - 1

        @pl.when(jnp.logical_and(j == 0, kd == 0))
        def _():
            min_val[...] = jnp.full_like(min_val, jnp.inf)
            min_idx[...] = jnp.zeros_like(min_idx)

        cross_part = jnp.dot(key_ref[...], query_ref[...],
                             preferred_element_type=jnp.float32)        # (tk, tq)

        @pl.when(kd == 0)
        def _():
            cross_acc[...] = cross_part

        @pl.when(kd > 0)
        def _():
            cross_acc[...] += cross_part

        @pl.when(kd == last_kd)
        def _():
            online_argmin(qterm_ref[...] - cross_acc[...])

        @pl.when(jnp.logical_and(j == last_j, kd == last_kd))
        def _():
            out_ref[...] = min_idx[...]


# ----------------------------------------------------------------------------
# Block_search equivalent
# ----------------------------------------------------------------------------
class BlockSearchPallas:
    """JAX/Pallas equivalent of GT-HAD Block_search (forward pass)."""

    def __init__(self, x_ori, wsize=15, wstride=5, use_bf16=False):
        self.ksize = wsize
        self.stride = wstride
        # bf16 MXU cross term (~4x MXU throughput, half the tile DMA); off by
        # default because near-tie argmins may differ from the f32 reference.
        self.use_bf16 = use_bf16
        self._vmem_cap = _vmem_capacity_bytes()

        # block_query = unfold(x_ori).squeeze(0).permute(1, 0)
        self.block_query = extract_blocks(x_ori, wsize, wstride)        # (Nq, D)
        nq, d = self.block_query.shape
        self.nq, self.d = nq, d

        # Feature-dim chunking: dk <= 1024 lanes, dp = nkd * dk >= D.
        dp0 = _round_up(d, 128)
        self.nkd = _cdiv(dp0, 1024)
        self.dk = _round_up(_cdiv(dp0, self.nkd), 128)
        self.dp = self.nkd * self.dk

        # Query tiling (streamed as a reduction axis; VMEM independent of Nq).
        self.tq = _round_up(nq, 8) if nq <= 256 else 256
        self.nq_pad = _round_up(nq, self.tq)

        # Cached query-side preprocessing (fixed for the module's lifetime):
        # pre-transposed (D, Nq) so the MXU consumes canonical (K, N) — no
        # per-tile transpose — plus hoisted half-term 0.5*||q||^2 - eps*sum(q);
        # +inf on padded query columns masks them out of the argmin.
        qT = jnp.zeros((self.dp, self.nq_pad), jnp.float32)
        qT = qT.at[:d, :nq].set(self.block_query.T)
        self.query_pT = qT.astype(jnp.bfloat16) if use_bf16 else qT
        qh = (0.5 * jnp.sum(self.block_query * self.block_query, axis=-1)
              - _EPS * jnp.sum(self.block_query, axis=-1)).astype(jnp.float32)
        self.qterm_p = jnp.full((1, self.nq_pad), jnp.inf, jnp.float32)
        self.qterm_p = self.qterm_p.at[0, :nq].set(qh)

    # ------------------------------------------------------------------
    def _nearest_query_index(self, block_key):
        """For every key block, index of its nearest query block (L2, torch eps)."""
        nk, d = block_key.shape
        assert d == self.d
        dk, nkd, dp, tq = self.dk, self.nkd, self.dp, self.tq

        # Key tiling: <= tk_max rows; once nk > 128 force >= 2 tiles so both
        # TensorCores get work on v7x (key axis is the "parallel" grid axis).
        # 128-MiB-VMEM parts (v5e/v6e) get tk up to 512 to halve query re-reads.
        tk_max = 512 if (self._vmem_cap >= (100 << 20) and nk >= 1024) else 256
        n_kt = 1 if nk <= 128 else max(2, _cdiv(nk, tk_max))
        tk = _round_up(_cdiv(nk, n_kt), 8)
        nk_pad = _round_up(nk, tk)

        key_p = jnp.zeros((nk_pad, dp), jnp.float32).at[:nk, :d].set(block_key)
        if self.use_bf16:
            key_p = key_p.astype(jnp.bfloat16)

        # Generation-aware VMEM budget (double-buffered tiles + scratch).
        itemsize = 2 if self.use_bf16 else 4
        vmem_need = (2 * tk * dk * itemsize              # key tiles
                     + 2 * dk * tq * itemsize            # query tiles
                     + 2 * 8 * max(tq, 128) * 4          # qterm row (sublane-padded)
                     + 2 * tk * 128 * 4                  # out tile (lane-padded)
                     + 2 * tk * 128 * 4                  # min/argmin scratch
                     + (tk * max(tq, 128) * 4 if nkd > 1 else 0))  # cross accumulator
        vmem_limit = min(int(self._vmem_cap * 0.75),
                         max(32 << 20, vmem_need + (8 << 20)))

        scratch = [pltpu.VMEM((tk, 1), jnp.float32),     # running min score
                   pltpu.VMEM((tk, 1), jnp.int32)]       # running argmin
        if nkd > 1:
            scratch.append(pltpu.VMEM((tk, tq), jnp.float32))  # cross-term accumulator

        out = pl.pallas_call(
            functools.partial(_dist_argmin_kernel, tq=tq, nkd=nkd),
            out_shape=jax.ShapeDtypeStruct((nk_pad, 1), jnp.int32),
            grid=(nk_pad // tk, self.nq_pad // tq, nkd),
            in_specs=[
                pl.BlockSpec((tk, dk), lambda i, j, kd: (i, kd)),    # key tile
                pl.BlockSpec((dk, tq), lambda i, j, kd: (kd, j)),    # query tile (pre-transposed)
                pl.BlockSpec((1, tq), lambda i, j, kd: (0, j)),      # query half-term row
            ],
            out_specs=pl.BlockSpec((tk, 1), lambda i, j, kd: (i, 0)),
            scratch_shapes=scratch,
            compiler_params=pltpu.CompilerParams(
                dimension_semantics=("parallel", "arbitrary", "arbitrary"),
                vmem_limit_bytes=vmem_limit),
        )(key_p, self.query_pT, self.qterm_p)
        return out[:nk, 0]

    # ------------------------------------------------------------------
    def __call__(self, x, match_vec, idx):
        block_key = extract_blocks(x, self.ksize, self.stride)          # (Nk, D)
        index = self._nearest_query_index(block_key)                    # (Nk,)
        flag = index == jnp.int32(idx)
        # match_vec[flag == 1] = 1   (functional update)
        return jnp.where(flag, jnp.ones_like(match_vec), match_vec)


# ----------------------------------------------------------------------------
# Pure-JAX reference (exact torch PairwiseDistance diff-form semantics)
# ----------------------------------------------------------------------------
def _reference_match(x, block_query, wsize, wstride, match_vec, idx):
    bk = extract_blocks(x, wsize, wstride)
    diff = bk[:, None, :] - block_query[None, :, :] + _EPS
    ref_dis = jnp.sqrt(jnp.sum(diff * diff, axis=-1))
    ref_index = jnp.argmin(ref_dis, axis=1)
    return jnp.where(ref_index == idx, jnp.ones_like(match_vec), match_vec)


if __name__ == "__main__":
    key = jax.random.PRNGKey(0)

    # (band, row, col, wsize, wstride)
    #  1) canonical tiny case (single tile everywhere)
    #  2) nk = nq = 324: multi key tiles + streamed/padded query axis
    #  3) D = 12*11*11 = 1452 > 1024 lanes: feature-dim chunk accumulation path
    configs = [(4, 16, 16, 5, 3), (4, 52, 52, 5, 3), (12, 35, 35, 11, 3)]

    for band, row, col, wsize, wstride in configs:
        key, k0, k1 = jax.random.split(key, 3)
        x_ori = jax.random.normal(k0, (1, band, row, col), dtype=jnp.float32)
        x = jax.random.normal(k1, (1, band, row, col), dtype=jnp.float32)

        out_h = (row + wstride - 1) // wstride
        out_w = (col + wstride - 1) // wstride
        num_blocks = out_h * out_w
        match_vec = jnp.zeros((num_blocks,), dtype=jnp.int32)
        idx = 3

        searcher = BlockSearchPallas(x_ori, wsize=wsize, wstride=wstride)
        result = searcher(x, match_vec, idx)
        result = jax.block_until_ready(result)

        ref_match = _reference_match(x, searcher.block_query, wsize, wstride,
                                     match_vec, idx)
        assert jnp.array_equal(result, ref_match), (result, ref_match)

    print("KERNEL_OK")
</pallas_src>

<mosaic_0001>
module attributes {stable_mosaic.version = 11 : i64} {
  func.func @_dist_argmin_kernel(%arg0: i32, %arg1: i32, %arg2: i32, %arg3: memref<40x128xf32, #tpu.memory_space<vmem>>, %arg4: memref<128x40xf32, #tpu.memory_space<vmem>>, %arg5: memref<1x40xf32, #tpu.memory_space<vmem>>, %arg6: memref<40x1xi32, #tpu.memory_space<vmem>>, %arg7: memref<40x1xf32, #tpu.memory_space<vmem>>, %arg8: memref<40x1xi32, #tpu.memory_space<vmem>>) attributes {dimension_semantics = [#tpu.dimension_semantics<parallel>, #tpu.dimension_semantics<arbitrary>, #tpu.dimension_semantics<arbitrary>], iteration_bounds = array<i64: 1, 1, 1>, scalar_prefetch = 0 : i64, scratch_operands = 2 : i64, tpu.core_type = #tpu.core_type<tc>, window_params = [{transform_indices = @transform_0, window_bounds = array<i64: 40, 128>}, {transform_indices = @transform_1, window_bounds = array<i64: 128, 40>}, {transform_indices = @transform_2, window_bounds = array<i64: 1, 40>}, {transform_indices = @transform_3, window_bounds = array<i64: 40, 1>}]} {
    %c0_i32 = arith.constant 0 : i32
    %0 = arith.cmpi eq, %arg1, %c0_i32 : i32
    %1 = arith.extui %0 : i1 to i32
    %c0_i32_0 = arith.constant 0 : i32
    %2 = arith.cmpi ne, %1, %c0_i32_0 : i32
    scf.if %2 {
      %cst_20 = arith.constant 0x7F800000 : f32
      %34 = vector.broadcast %cst_20 : f32 to vector<40x1xf32>
      %c0_21 = arith.constant 0 : index
      %c0_22 = arith.constant 0 : index
      %35 = vector.load %arg7[%c0_21, %c0_22] : memref<40x1xf32, #tpu.memory_space<vmem>>, vector<40x1xf32>
      tpu.vector_store %arg7[%c0_21, %c0_22], %34 {strides = array<i32>} : memref<40x1xf32, #tpu.memory_space<vmem>>, vector<40x1xf32>,
      %c0_i32_23 = arith.constant 0 : i32
      %36 = vector.broadcast %c0_i32_23 : i32 to vector<40x1xi32>
      %c0_24 = arith.constant 0 : index
      %c0_25 = arith.constant 0 : index
      %37 = vector.load %arg8[%c0_24, %c0_25] : memref<40x1xi32, #tpu.memory_space<vmem>>, vector<40x1xi32>
      tpu.vector_store %arg8[%c0_24, %c0_25], %36 {strides = array<i32>} : memref<40x1xi32, #tpu.memory_space<vmem>>, vector<40x1xi32>,
    } else {
    }
    %c0 = arith.constant 0 : index
    %c0_1 = arith.constant 0 : index
    %3 = vector.load %arg3[%c0, %c0_1] : memref<40x128xf32, #tpu.memory_space<vmem>>, vector<40x128xf32>
    %c0_2 = arith.constant 0 : index
    %c0_3 = arith.constant 0 : index
    %4 = vector.load %arg4[%c0_2, %c0_3] : memref<128x40xf32, #tpu.memory_space<vmem>>, vector<128x40xf32>
    %cst = arith.constant dense<0.000000e+00> : vector<40x40xf32>
    %5 = tpu.matmul %3, %4, %cst {dimension_numbers = #tpu.dot_dimension_numbers<[1], [0], [0], [1], [0, 0, 1, 1], [], []>} : vector<40x128xf32>, vector<128x40xf32>, vector<40x40xf32> -> vector<40x40xf32>
    %c0_4 = arith.constant 0 : index
    %c0_5 = arith.constant 0 : index
    %6 = vector.load %arg5[%c0_4, %c0_5] : memref<1x40xf32, #tpu.memory_space<vmem>>, vector<1x40xf32>
    %7 = vector.broadcast %6 : vector<1x40xf32> to vector<40x40xf32>
    %8 = arith.subf %7, %5 : vector<40x40xf32>
    %cst_6 = arith.constant dense<0x7F800000> : vector<40xf32>
    %9 = vector.multi_reduction <minimumf>, %8, %cst_6 [1] : vector<40x40xf32> to vector<40xf32>
    %10 = vector.shape_cast %9 : vector<40xf32> to vector<40x1xf32>
    %11 = tpu.iota {dimensions = array<i32: 1>} : vector<1x40xi32>
    %12 = vector.broadcast %10 : vector<40x1xf32> to vector<40x40xf32>
    %13 = arith.cmpf ole, %8, %12 : vector<40x40xf32>
    %c1073741824_i32 = arith.constant 1073741824 : i32
    %14 = vector.shape_cast %11 : vector<1x40xi32> to vector<1x40xi32>
    %15 = vector.broadcast %14 : vector<1x40xi32> to vector<40x40xi32>
    %16 = vector.broadcast %c1073741824_i32 : i32 to vector<40x40xi32>
    %17 = arith.select %13, %15, %16 : vector<40x40xi1>, vector<40x40xi32>
    %cst_7 = arith.constant dense<2147483647> : vector<40xi32>
    %18 = vector.multi_reduction <minsi>, %17, %cst_7 [1] : vector<40x40xi32> to vector<40xi32>
    %19 = vector.shape_cast %18 : vector<40xi32> to vector<40x1xi32>
    %c40_i32 = arith.constant 40 : i32
    %20 = arith.muli %arg1, %c40_i32 : i32
    %21 = vector.broadcast %20 : i32 to vector<40x1xi32>
    %22 = arith.addi %19, %21 : vector<40x1xi32>
    %c0_8 = arith.constant 0 : index
    %c0_9 = arith.constant 0 : index
    %23 = vector.load %arg7[%c0_8, %c0_9] : memref<40x1xf32, #tpu.memory_space<vmem>>, vector<40x1xf32>
    %24 = arith.cmpf olt, %10, %23 : vector<40x1xf32>
    %c0_10 = arith.constant 0 : index
    %c0_11 = arith.constant 0 : index
    %25 = vector.load %arg8[%c0_10, %c0_11] : memref<40x1xi32, #tpu.memory_space<vmem>>, vector<40x1xi32>
    %26 = arith.select %24, %22, %25 : vector<40x1xi1>, vector<40x1xi32>
    %c0_12 = arith.constant 0 : index
    %c0_13 = arith.constant 0 : index
    %27 = vector.load %arg8[%c0_12, %c0_13] : memref<40x1xi32, #tpu.memory_space<vmem>>, vector<40x1xi32>
    tpu.vector_store %arg8[%c0_12, %c0_13], %26 {strides = array<i32>} : memref<40x1xi32, #tpu.memory_space<vmem>>, vector<40x1xi32>,
    %c0_14 = arith.constant 0 : index
    %c0_15 = arith.constant 0 : index
    %28 = vector.load %arg7[%c0_14, %c0_15] : memref<40x1xf32, #tpu.memory_space<vmem>>, vector<40x1xf32>
    %29 = arith.select %24, %10, %28 : vector<40x1xi1>, vector<40x1xf32>
    %c0_16 = arith.constant 0 : index
    %c0_17 = arith.constant 0 : index
    %30 = vector.load %arg7[%c0_16, %c0_17] : memref<40x1xf32, #tpu.memory_space<vmem>>, vector<40x1xf32>
    tpu.vector_store %arg7[%c0_16, %c0_17], %29 {strides = array<i32>} : memref<40x1xf32, #tpu.memory_space<vmem>>, vector<40x1xf32>,
    %c0_i32_18 = arith.constant 0 : i32
    %31 = arith.cmpi eq, %arg1, %c0_i32_18 : i32
    %32 = arith.extui %31 : i1 to i32
    %c0_i32_19 = arith.constant 0 : i32
    %33 = arith.cmpi ne, %32, %c0_i32_19 : i32
    scf.if %33 {
      %c0_20 = arith.constant 0 : index
      %c0_21 = arith.constant 0 : index
      %34 = vector.load %arg8[%c0_20, %c0_21] : memref<40x1xi32, #tpu.memory_space<vmem>>, vector<40x1xi32>
      %c0_22 = arith.constant 0 : index
      %c0_23 = arith.constant 0 : index
      %35 = vector.load %arg6[%c0_22, %c0_23] : memref<40x1xi32, #tpu.memory_space<vmem>>, vector<40x1xi32>
      tpu.vector_store %arg6[%c0_22, %c0_23], %34 {strides = array<i32>} : memref<40x1xi32, #tpu.memory_space<vmem>>, vector<40x1xi32>,
    } else {
    }
    return
  }
  func.func @transform_0(%arg0: i32, %arg1: i32, %arg2: i32) -> (i32, i32) {
    %c0_i32 = arith.constant 0 : i32
    return %arg0, %arg2 : i32, i32
  }
  func.func @transform_1(%arg0: i32, %arg1: i32, %arg2: i32) -> (i32, i32) {
    %c0_i32 = arith.constant 0 : i32
    return %arg2, %arg1 : i32, i32
  }
  func.func @transform_2(%arg0: i32, %arg1: i32, %arg2: i32) -> (i32, i32) {
    %c0_i32 = arith.constant 0 : i32
    %c0_i32_0 = arith.constant 0 : i32
    return %c0_i32, %arg1 : i32, i32
  }
  func.func @transform_3(%arg0: i32, %arg1: i32, %arg2: i32) -> (i32, i32) {
    %c0_i32 = arith.constant 0 : i32
    %c0_i32_0 = arith.constant 0 : i32
    return %arg0, %c0_i32 : i32, i32
  }
}

</mosaic_0001>

<llo_original>
// kernel: tpu_custom_call.1
$region0: #{tpu_custom_call.1}
  #allocation0 [shape = 'u32[]', space=smem, size = 0x4, offset = 0x4, fixed_abs, tag = 'smem constant byte address 0x4 - core index']
  #allocation1 [shape = 'u32[144,128]{1,0:T(1,128)}', space=vmem, size = 0x12000, scoped, tag = 'internal scratch']
  #allocation2 [shape = 'f32[40,1]{1,0:T(8,128)}', space=vmem, size = 0x5000, scoped, tag = 'scratch operand']
  #allocation3 [shape = 's32[40,1]{1,0:T(8,128)}', space=vmem, size = 0x5000, scoped, tag = 'scratch operand']
  %s0 = inlined_call_operand.vmem [shape: f32[40,128], index: 0, kind: input, shape index: {}]
  %s1 = inlined_call_operand.vmem [shape: f32[128,40], index: 1, kind: input, shape index: {}]
  %s2 = inlined_call_operand.vmem [shape: f32[1,40], index: 2, kind: input, shape index: {}]
  %s3 = inlined_call_operand.vmem [shape: s32[40,1], index: 3, kind: output, shape index: {}]
  %s4 = sld [smem:[#allocation0]]
  $region30: #{tpu_custom_call.1} parent=0
    _
  %s6 = ssub.s32 1, %s4
  %s7 = scalar_select 0, %s6, %s4
  // Predicated region
  $region2: #{tpu_custom_call.1} parent=0 // pred_check
    _
  $region3: #{tpu_custom_call.1} parent=0 // pred_check_branch
    %9 = sbr.rel (0) target = $region5
  $region4: #{tpu_custom_call.1} parent=0 // pred_region
    _
  $region5: #{tpu_custom_call.1} parent=0 // pred_fallthru
    _
  // Predicated region
  $region6: #{tpu_custom_call.1} parent=0 // pred_check
    _
  $region7: #{tpu_custom_call.1} parent=0 // pred_check_branch
    %11 = sbr.rel (0) target = $region9
  $region8: #{tpu_custom_call.1} parent=0 // pred_region
    _
  $region9: #{tpu_custom_call.1} parent=0 // pred_fallthru
    _
  // Predicated region
  $region10: #{tpu_custom_call.1} parent=0 // pred_check
    _
  $region11: #{tpu_custom_call.1} parent=0 // pred_check_branch
    %13 = sbr.rel (0) target = $region13
  $region12: #{tpu_custom_call.1} parent=0 // pred_region
    _
  $region13: #{tpu_custom_call.1} parent=0 // pred_fallthru
    _
  %p14 = scmp.eq.s32.totalorder 0, 0
  // Predicated region
  $region14: #{tpu_custom_call.1} parent=0 // pred_check
    %p15 = pneg %p14
  $region15: #{tpu_custom_call.1} parent=0 // pred_check_branch
    %17 = sbr.rel (%p15) target = $region17
  $region16: #{tpu_custom_call.1} parent=0 // pred_region
    %vm18 = vcmask 7168
    %19 = vst.msk [vmem:[#allocation2] sm:$0xff] %vm18, inf
    %20 = vst.msk [vmem:[#allocation2 + $0x8] sm:$0xff] %vm18, inf
    %21 = vst.msk [vmem:[#allocation2 + $0x10] sm:$0xff] %vm18, inf
    %22 = vst.msk [vmem:[#allocation2 + $0x18] sm:$0xff] %vm18, inf
    %23 = vst.msk [vmem:[#allocation2 + $0x20] sm:$0xff] %vm18, inf
    %24 = vst.msk [vmem:[#allocation3] sm:$0xff] %vm18, 0
    %25 = vst.msk [vmem:[#allocation3 + $0x8] sm:$0xff] %vm18, 0
    %26 = vst.msk [vmem:[#allocation3 + $0x10] sm:$0xff] %vm18, 0
    %27 = vst.msk [vmem:[#allocation3 + $0x18] sm:$0xff] %vm18, 0
    %28 = vst.msk [vmem:[#allocation3 + $0x20] sm:$0xff] %vm18, 0
  $region17: #{tpu_custom_call.1} parent=0 // pred_fallthru
    _
  %v29 = vld [vmem:[%s0] sm:$0xff]
  %v30 = vld [vmem:[%s0 + $0x8] sm:$0xff]
  %v31 = vld [vmem:[%s0 + $0x10] sm:$0xff]
  %v32 = vld [vmem:[%s0 + $0x18] sm:$0xff]
  %v33 = vld [vmem:[%s0 + $0x20] sm:$0xff]
  %v34 = vld [vmem:[%s1] sm:$0xff]
  %v35 = vld [vmem:[%s1 + $0x8] sm:$0xff]
  %v36 = vld [vmem:[%s1 + $0x10] sm:$0xff]
  %v37 = vld [vmem:[%s1 + $0x18] sm:$0xff]
  %v38 = vld [vmem:[%s1 + $0x20] sm:$0xff]
  %v39 = vld [vmem:[%s1 + $0x28] sm:$0xff]
  %v40 = vld [vmem:[%s1 + $0x30] sm:$0xff]
  %v41 = vld [vmem:[%s1 + $0x38] sm:$0xff]
  %v42 = vld [vmem:[%s1 + $0x40] sm:$0xff]
  %v43 = vld [vmem:[%s1 + $0x48] sm:$0xff]
  %v44 = vld [vmem:[%s1 + $0x50] sm:$0xff]
  %v45 = vld [vmem:[%s1 + $0x58] sm:$0xff]
  %v46 = vld [vmem:[%s1 + $0x60] sm:$0xff]
  %v47 = vld [vmem:[%s1 + $0x68] sm:$0xff]
  %v48 = vld [vmem:[%s1 + $0x70] sm:$0xff]
  %v49 = vld [vmem:[%s1 + $0x78] sm:$0xff]
  %50 = vmatprep.subr.mxu0 0.0
  %51 = vmatpush1.msra.mxu0 %v49
  %52 = vmatprep.subr.mxu0 0.0
  %53 = vmatpush1.msra.mxu0 %v48
  %54 = vmatprep.subr.mxu0 0.0
  %55 = vmatpush1.msra.mxu0 %v47
  %56 = vmatprep.subr.mxu0 0.0
  %57 = vmatpush1.msra.mxu0 %v46
  %58 = vmatprep.subr.mxu0 0.0
  %59 = vmatpush1.msra.mxu0 %v45
  %60 = vmatprep.subr.mxu0 0.0
  %61 = vmatpush1.msra.mxu0 %v44
  %62 = vmatprep.subr.mxu0 0.0
  %63 = vmatpush1.msra.mxu0 %v43
  %64 = vmatprep.subr.mxu0 0.0
  %65 = vmatpush1.msra.mxu0 %v42
  %66 = vmatprep.subr.mxu0 0.0
  %67 = vmatpush1.msra.mxu0 %v41
  %68 = vmatprep.subr.mxu0 0.0
  %69 = vmatpush1.msra.mxu0 %v40
  %70 = vmatprep.subr.mxu0 0.0
  %71 = vmatpush1.msra.mxu0 %v39
  %72 = vmatprep.subr.mxu0 0.0
  %73 = vmatpush1.msra.mxu0 %v38
  %74 = vmatprep.subr.mxu0 0.0
  %75 = vmatpush1.msra.mxu0 %v37
  %76 = vmatprep.subr.mxu0 0.0
  %77 = vmatpush1.msra.mxu0 %v36
  %78 = vmatprep.subr.mxu0 0.0
  %79 = vmatpush1.msra.mxu0 %v35
  %80 = vmatprep.subr.mxu0 0.0
  %81 = vmatpush1.msra.mxu0 %v34
  %82 = vmatprep.subr.mxu0 0.0
  %83 = vmatpush2.msra.mxu0 0.0
  %84 = vmatprep.subr.mxu0 0.0
  %85 = vmatpush2.msra.mxu0 0.0
  %86 = vmatprep.subr.mxu0 0.0
  %87 = vmatpush2.msra.mxu0 0.0
  %88 = vmatprep.subr.mxu0 0.0
  %89 = vmatpush2.msra.mxu0 0.0
  %90 = vmatprep.subr.mxu0 0.0
  %91 = vmatpush2.msra.mxu0 0.0
  %92 = vmatprep.subr.mxu0 0.0
  %93 = vmatpush2.msra.mxu0 0.0
  %94 = vmatprep.subr.mxu0 0.0
  %95 = vmatpush2.msra.mxu0 0.0
  %96 = vmatprep.subr.mxu0 0.0
  %97 = vmatpush2.msra.mxu0 0.0
  %98 = vmatprep.subr.mxu0 0.0
  %99 = vmatpush2.msra.mxu0 0.0
  %100 = vmatprep.subr.mxu0 0.0
  %101 = vmatpush2.msra.mxu0 0.0
  %102 = vmatprep.subr.mxu0 0.0
  %103 = vmatpush2.msra.mxu0 0.0
  %104 = vmatprep.subr.mxu0 0.0
  %105 = vmatpush2.msra.mxu0 0.0
  %106 = vmatprep.subr.mxu0 0.0
  %107 = vmatpush2.msra.mxu0 0.0
  %108 = vmatprep.subr.mxu0 0.0
  %109 = vmatpush2.msra.mxu0 0.0
  %110 = vmatprep.subr.mxu0 0.0
  %111 = vmatpush2.msra.mxu0 0.0
  %112 = vmatprep.subr.mxu0 0.0
  %113 = vmatpush2.msra.mxu0 0.0
  %114 = vmatprep.mubr.f32.mxu0 0.0
  %115 = vmatmul.mubr.f32.gmra.mxu0 %v29
  %v116 = vpop.f32.mrf.mxu0
  %v117 = vadd.f32 0.0, %v116
  %v118 = vpop.f32.mrf.mxu0
  %119 = vmatprep.mubr.f32.mxu0 0.0
  %120 = vmatmul.mubr.f32.gmra.mxu0 %v30
  %v121 = vpop.f32.mrf.mxu0
  %v122 = vadd.f32 0.0, %v121
  %v123 = vpop.f32.mrf.mxu0
  %124 = vmatprep.mubr.f32.mxu0 0.0
  %125 = vmatmul.mubr.f32.gmra.mxu0 %v31
  %v126 = vpop.f32.mrf.mxu0
  %v127 = vadd.f32 0.0, %v126
  %v128 = vpop.f32.mrf.mxu0
  %129 = vmatprep.mubr.f32.mxu0 0.0
  %130 = vmatmul.mubr.f32.gmra.mxu0 %v32
  %v131 = vpop.f32.mrf.mxu0
  %v132 = vadd.f32 0.0, %v131
  %v133 = vpop.f32.mrf.mxu0
  %134 = vmatprep.mubr.f32.mxu0 0.0
  %135 = vmatmul.mubr.f32.gmra.mxu0 %v33
  %v136 = vpop.f32.mrf.mxu0
  %v137 = vadd.f32 0.0, %v136
  %v138 = vpop.f32.mrf.mxu0
  %139 = vdwg.mxu0
  %v140 = vld [vmem:[%s2] sm:$0x1]
  %v142 = vlaneseq
  %v143 = vshrl.u32 %v142, 7
  %v144 = vsub.s32 0, %v143
  %v145 = vrot.slane %v140, %v144
  %v147 = vsub.f32 %v145, %v117
  %v148 = vsub.f32 %v145, %v122
  %v149 = vsub.f32 %v145, %v127
  %v150 = vsub.f32 %v145, %v132
  %v151 = vsub.f32 %v145, %v137
  %vm152 = vcmask 326656
  %v153 = vsel %vm152, %v147, inf
  %154 = vmin.xlane.f32.xlu0 %v153
  %v155 = vpop.xlane.xlu0 %154
  %v156 = vsel %vm152, %v148, inf
  %157 = vmin.xlane.f32.xlu0 %v156
  %v158 = vpop.xlane.xlu0 %157
  %v159 = vsel %vm152, %v149, inf
  %160 = vmin.xlane.f32.xlu0 %v159
  %v161 = vpop.xlane.xlu0 %160
  %v162 = vsel %vm152, %v150, inf
  %163 = vmin.xlane.f32.xlu0 %v162
  %v164 = vpop.xlane.xlu0 %163
  %v165 = vsel %vm152, %v151, inf
  %166 = vmin.xlane.f32.xlu0 %v165
  %v167 = vpop.xlane.xlu0 %166
  %v168 = vlaneseq
  %v169 = vand.u32 %v168, 127
  %vm170 = vcmp.le.f32.partialorder %v147, %v155
  %vm171 = vcmp.le.f32.partialorder %v148, %v158
  %vm172 = vcmp.le.f32.partialorder %v149, %v161
  %vm173 = vcmp.le.f32.partialorder %v150, %v164
  %vm174 = vcmp.le.f32.partialorder %v151, %v167
  %v175 = vsel %vm170, %v169, 1073741824
  %v176 = vsel %vm171, %v169, 1073741824
  %v177 = vsel %vm172, %v169, 1073741824
  %v178 = vsel %vm173, %v169, 1073741824
  %v179 = vsel %vm174, %v169, 1073741824
  %v180 = vsel %vm152, %v175, 2147483647
  %v181 = vand.u32 %v180, 65535
  %v182 = vshra.s32 %v180, 16
  %v183 = vcvt.s32.f32 %v181
  %v184 = vcvt.s32.f32 %v182
  %185 = vmin.xlane.f32.xlu0 %v184
  %v186 = vpop.xlane.xlu0 %185
  %vm187 = vcmp.eq.f32.partialorder %v184, %v186
  %v188 = vsel %vm187, %v183, inf
  %189 = vmin.xlane.f32.xlu0 %v188
  %v190 = vpop.xlane.xlu0 %189
  %v191 = vcvt.f32.s32 %v190
  %v192 = vcvt.f32.s32 %v186
  %v193 = vshll.u32 %v192, 16
  %v194 = vadd.s32 %v193, %v191
  %v195 = vsel %vm152, %v176, 2147483647
  %v196 = vand.u32 %v195, 65535
  %v197 = vshra.s32 %v195, 16
  %v198 = vcvt.s32.f32 %v196
  %v199 = vcvt.s32.f32 %v197
  %200 = vmin.xlane.f32.xlu0 %v199
  %v201 = vpop.xlane.xlu0 %200
  %vm202 = vcmp.eq.f32.partialorder %v199, %v201
  %v203 = vsel %vm202, %v198, inf
  %204 = vmin.xlane.f32.xlu0 %v203
  %v205 = vpop.xlane.xlu0 %204
  %v206 = vcvt.f32.s32 %v205
  %v207 = vcvt.f32.s32 %v201
  %v208 = vshll.u32 %v207, 16
  %v209 = vadd.s32 %v208, %v206
  %v210 = vsel %vm152, %v177, 2147483647
  %v211 = vand.u32 %v210, 65535
  %v212 = vshra.s32 %v210, 16
  %v213 = vcvt.s32.f32 %v211
  %v214 = vcvt.s32.f32 %v212
  %215 = vmin.xlane.f32.xlu0 %v214
  %v216 = vpop.xlane.xlu0 %215
  %vm217 = vcmp.eq.f32.partialorder %v214, %v216
  %v218 = vsel %vm217, %v213, inf
  %219 = vmin.xlane.f32.xlu0 %v218
  %v220 = vpop.xlane.xlu0 %219
  %v221 = vcvt.f32.s32 %v220
  %v222 = vcvt.f32.s32 %v216
  %v223 = vshll.u32 %v222, 16
  %v224 = vadd.s32 %v223, %v221
  %v225 = vsel %vm152, %v178, 2147483647
  %v226 = vand.u32 %v225, 65535
  %v227 = vshra.s32 %v225, 16
  %v228 = vcvt.s32.f32 %v226
  %v229 = vcvt.s32.f32 %v227
  %230 = vmin.xlane.f32.xlu0 %v229
  %v231 = vpop.xlane.xlu0 %230
  %vm232 = vcmp.eq.f32.partialorder %v229, %v231
  %v233 = vsel %vm232, %v228, inf
  %234 = vmin.xlane.f32.xlu0 %v233
  %v235 = vpop.xlane.xlu0 %234
  %v236 = vcvt.f32.s32 %v235
  %v237 = vcvt.f32.s32 %v231
  %v238 = vshll.u32 %v237, 16
  %v239 = vadd.s32 %v238, %v236
  %v240 = vsel %vm152, %v179, 2147483647
  %v241 = vand.u32 %v240, 65535
  %v242 = vshra.s32 %v240, 16
  %v243 = vcvt.s32.f32 %v241
  %v244 = vcvt.s32.f32 %v242
  %245 = vmin.xlane.f32.xlu0 %v244
  %v246 = vpop.xlane.xlu0 %245
  %vm247 = vcmp.eq.f32.partialorder %v244, %v246
  %v248 = vsel %vm247, %v243, inf
  %249 = vmin.xlane.f32.xlu0 %v248
  %v250 = vpop.xlane.xlu0 %249
  %v251 = vcvt.f32.s32 %v250
  %v252 = vcvt.f32.s32 %v246
  %v253 = vshll.u32 %v252, 16
  %v254 = vadd.s32 %v253, %v251
  %s255 = smul.u32 0, 40
  %v256 = vstv %s255
  %v257 = vadd.s32 %v194, %v256
  %v258 = vadd.s32 %v209, %v256
  %v259 = vadd.s32 %v224, %v256
  %v260 = vadd.s32 %v239, %v256
  %v261 = vadd.s32 %v254, %v256
  %v262 = vld [vmem:[#allocation2] sm:$0xff]
  %v263 = vld [vmem:[#allocation2 + $0x8] sm:$0xff]
  %v264 = vld [vmem:[#allocation2 + $0x10] sm:$0xff]
  %v265 = vld [vmem:[#allocation2 + $0x18] sm:$0xff]
  %v266 = vld [vmem:[#allocation2 + $0x20] sm:$0xff]
  %vm267 = vcmp.lt.f32.partialorder %v155, %v262
  %vm268 = vcmp.lt.f32.partialorder %v158, %v263
  %vm269 = vcmp.lt.f32.partialorder %v161, %v264
  %vm270 = vcmp.lt.f32.partialorder %v164, %v265
  %vm271 = vcmp.lt.f32.partialorder %v167, %v266
  %v272 = vld [vmem:[#allocation3] sm:$0xff]
  %v273 = vld [vmem:[#allocation3 + $0x8] sm:$0xff]
  %v274 = vld [vmem:[#allocation3 + $0x10] sm:$0xff]
  %v275 = vld [vmem:[#allocation3 + $0x18] sm:$0xff]
  %v276 = vld [vmem:[#allocation3 + $0x20] sm:$0xff]
  %v277 = vsel %vm267, %v257, %v272
  %v278 = vsel %vm268, %v258, %v273
  %v279 = vsel %vm269, %v259, %v274
  %v280 = vsel %vm270, %v260, %v275
  %v281 = vsel %vm271, %v261, %v276
  %vm282 = vcmask 7168
  %283 = vst.msk [vmem:[#allocation3] sm:$0xff] %vm282, %v277
  %284 = vst.msk [vmem:[#allocation3 + $0x8] sm:$0xff] %vm282, %v278
  %285 = vst.msk [vmem:[#allocation3 + $0x10] sm:$0xff] %vm282, %v279
  %286 = vst.msk [vmem:[#allocation3 + $0x18] sm:$0xff] %vm282, %v280
  %287 = vst.msk [vmem:[#allocation3 + $0x20] sm:$0xff] %vm282, %v281
  %v288 = vld [vmem:[#allocation2] sm:$0xff]
  %v289 = vld [vmem:[#allocation2 + $0x8] sm:$0xff]
  %v290 = vld [vmem:[#allocation2 + $0x10] sm:$0xff]
  %v291 = vld [vmem:[#allocation2 + $0x18] sm:$0xff]
  %v292 = vld [vmem:[#allocation2 + $0x20] sm:$0xff]
  %v293 = vsel %vm267, %v155, %v288
  %v294 = vsel %vm268, %v158, %v289
  %v295 = vsel %vm269, %v161, %v290
  %v296 = vsel %vm270, %v164, %v291
  %v297 = vsel %vm271, %v167, %v292
  %298 = vst.msk [vmem:[#allocation2] sm:$0xff] %vm282, %v293
  %299 = vst.msk [vmem:[#allocation2 + $0x8] sm:$0xff] %vm282, %v294
  %300 = vst.msk [vmem:[#allocation2 + $0x10] sm:$0xff] %vm282, %v295
  %301 = vst.msk [vmem:[#allocation2 + $0x18] sm:$0xff] %vm282, %v296
  %302 = vst.msk [vmem:[#allocation2 + $0x20] sm:$0xff] %vm282, %v297
  // Predicated region
  $region18: #{tpu_custom_call.1} parent=0 // pred_check
    %p303 = pneg %p14
  $region19: #{tpu_custom_call.1} parent=0 // pred_check_branch
    %305 = sbr.rel (%p303) target = $region21
  $region20: #{tpu_custom_call.1} parent=0 // pred_region
    %v306 = vld [vmem:[#allocation3] sm:$0xff]
    %v307 = vld [vmem:[#allocation3 + $0x8] sm:$0xff]
    %v308 = vld [vmem:[#allocation3 + $0x10] sm:$0xff]
    %v309 = vld [vmem:[#allocation3 + $0x18] sm:$0xff]
    %v310 = vld [vmem:[#allocation3 + $0x20] sm:$0xff]
    %311 = vst.msk [vmem:[%s3] sm:$0xff] %vm282, %v306
    %312 = vst.msk [vmem:[%s3 + $0x8] sm:$0xff] %vm282, %v307
    %313 = vst.msk [vmem:[%s3 + $0x10] sm:$0xff] %vm282, %v308
    %314 = vst.msk [vmem:[%s3 + $0x18] sm:$0xff] %vm282, %v309
    %315 = vst.msk [vmem:[%s3 + $0x20] sm:$0xff] %vm282, %v310
  $region21: #{tpu_custom_call.1} parent=0 // pred_fallthru
    _
  // Predicated region
  $region22: #{tpu_custom_call.1} parent=0 // pred_check
    _
  $region23: #{tpu_custom_call.1} parent=0 // pred_check_branch
    %317 = sbr.rel (0) target = $region25
  $region24: #{tpu_custom_call.1} parent=0 // pred_region
    _
  $region25: #{tpu_custom_call.1} parent=0 // pred_fallthru
    _
  // Predicated region
  $region26: #{tpu_custom_call.1} parent=0 // pred_check
    _
  $region27: #{tpu_custom_call.1} parent=0 // pred_check_branch
    %319 = sbr.rel (0) target = $region29
  $region28: #{tpu_custom_call.1} parent=0 // pred_region
    _
  $region29: #{tpu_custom_call.1} parent=0 // pred_fallthru
    _

</llo_original>
